<compile_context>
chip_gen: v7x
topology: tpu7x:2x2x1
jax: 0.10.0
libtpu: 0.0.40
codegen_flags: <defaults>
</compile_context>

<pallas_src>
import functools

import jax
import jax.numpy as jnp
from jax.experimental import pallas as pl
from jax.experimental.pallas import tpu as pltpu  # noqa: F401  (kept for TPU-specific params if needed)


def _masked_l1_mean_kernel(pred_ref, target_ref, mask_ref, out_ref, *, inv_n):
    # pred_ref, target_ref, mask_ref: (B, C*K) f32, lane-dense flat slabs.
    # out_ref: (1, 1) f32 -- the final mean loss.
    diff = jnp.abs(pred_ref[...] - target_ref[...]) * mask_ref[...]
    # Full reduce (kept 2-D via keepdims) and mean divide fused into the kernel.
    out_ref[...] = jnp.sum(diff, keepdims=True) * inv_n


def l1_loss(output_nchw, mask, ind, target):
    """Pallas implementation of L1Loss.forward(output, mask, ind, target)."""
    B, C, H, W = output_nchw.shape
    K = ind.shape[1]
    HW = H * W
    CK = C * K

    # Free reshape -- stays in NCHW memory layout, no transpose of the feature map.
    feat = output_nchw.reshape(B, C, HW)                           # (B, C, HW), native dtype
    idx = jnp.broadcast_to(ind.astype(jnp.int32)[:, None, :], (B, C, K))

    # Gather only the needed B*C*K elements straight from the NCHW view (equivalent
    # to permute+view+gather in the PyTorch code, without materializing the
    # transposed feature map), then cast the small result to f32.
    pred = jnp.take_along_axis(feat, idx, axis=2)                  # (B, C, K), native dtype
    pred_flat = pred.astype(jnp.float32).reshape(B, CK)            # (B, C*K) f32

    # Layout prep for the tiny target / mask tensors: one transpose+reshape each,
    # producing the same lane-dense (B, C*K) slab layout as pred.
    target_flat = jnp.swapaxes(target.astype(jnp.float32), 1, 2).reshape(B, CK)
    mask_flat = jnp.broadcast_to(
        mask.astype(jnp.float32)[:, None, :], (B, C, K)).reshape(B, CK)

    inv_n = 1.0 / float(B * K * C)

    out = pl.pallas_call(
        functools.partial(_masked_l1_mean_kernel, inv_n=inv_n),
        out_shape=jax.ShapeDtypeStruct((1, 1), jnp.float32),
        grid=(1,),                                                 # single step: all data fits VMEM
        in_specs=[
            pl.BlockSpec((B, CK), lambda i: (0, 0)),               # pred
            pl.BlockSpec((B, CK), lambda i: (0, 0)),               # target
            pl.BlockSpec((B, CK), lambda i: (0, 0)),               # mask (pre-broadcast)
        ],
        out_specs=pl.BlockSpec((1, 1), lambda i: (0, 0)),
    )(pred_flat, target_flat, mask_flat)

    # 'elementwise_mean' (== 'mean'): mean over all B*K*C elements, computed in-kernel.
    return out[0, 0]


def _ref_l1_loss(output_nchw, mask, ind, target):
    """Pure-JAX reference matching the PyTorch module."""
    B, C, H, W = output_nchw.shape
    feat = jnp.transpose(output_nchw, (0, 2, 3, 1)).reshape(B, H * W, C)
    pred = jax.vmap(lambda f, i: f[i])(feat, ind)                  # (B, K, C)
    m = mask.astype(jnp.float32)[:, :, None]
    return jnp.mean(jnp.abs(pred * m - target * m))


if __name__ == "__main__":
    B, C, H, W, K = 2, 4, 16, 16, 8
    key = jax.random.PRNGKey(0)
    k1, k2, k3, k4 = jax.random.split(key, 4)

    output = jax.random.normal(k1, (B, C, H, W), jnp.float32)      # NCHW, like PyTorch
    target = jax.random.normal(k2, (B, K, C), jnp.float32)
    ind = jax.random.randint(k3, (B, K), 0, H * W, jnp.int32)
    mask = jax.random.bernoulli(k4, 0.7, (B, K)).astype(jnp.int32)

    loss = jax.jit(l1_loss)(output, mask, ind, target)
    loss = jax.block_until_ready(loss)

    ref = _ref_l1_loss(output, mask, ind, target)
    assert jnp.allclose(loss, ref, atol=1e-5, rtol=1e-5), (float(loss), float(ref))
    print("KERNEL_OK")
</pallas_src>

<mosaic_0001>
module attributes {stable_mosaic.version = 11 : i64} {
  func.func @_masked_l1_mean_kernel(%arg0: i32, %arg1: memref<2x32xf32, #tpu.memory_space<vmem>>, %arg2: memref<2x32xf32, #tpu.memory_space<vmem>>, %arg3: memref<2x32xf32, #tpu.memory_space<vmem>>, %arg4: memref<1x1xf32, #tpu.memory_space<vmem>>) attributes {dimension_semantics = [#tpu.dimension_semantics<arbitrary>], iteration_bounds = array<i64: 1>, scalar_prefetch = 0 : i64, scratch_operands = 0 : i64, tpu.core_type = #tpu.core_type<tc>, window_params = [{pipeline_mode = #tpu.pipeline_mode<synchronous>, transform_indices = @transform_0, window_bounds = array<i64: 2, 32>}, {pipeline_mode = #tpu.pipeline_mode<synchronous>, transform_indices = @transform_1, window_bounds = array<i64: 2, 32>}, {pipeline_mode = #tpu.pipeline_mode<synchronous>, transform_indices = @transform_2, window_bounds = array<i64: 2, 32>}, {pipeline_mode = #tpu.pipeline_mode<synchronous>, transform_indices = @transform_3, window_bounds = array<i64: 1, 1>}]} {
    %c0 = arith.constant 0 : index
    %c0_0 = arith.constant 0 : index
    %0 = vector.load %arg1[%c0, %c0_0] : memref<2x32xf32, #tpu.memory_space<vmem>>, vector<2x32xf32>
    %c0_1 = arith.constant 0 : index
    %c0_2 = arith.constant 0 : index
    %1 = vector.load %arg2[%c0_1, %c0_2] : memref<2x32xf32, #tpu.memory_space<vmem>>, vector<2x32xf32>
    %2 = arith.subf %0, %1 : vector<2x32xf32>
    %3 = math.absf %2 : vector<2x32xf32>
    %c0_3 = arith.constant 0 : index
    %c0_4 = arith.constant 0 : index
    %4 = vector.load %arg3[%c0_3, %c0_4] : memref<2x32xf32, #tpu.memory_space<vmem>>, vector<2x32xf32>
    %5 = arith.mulf %3, %4 : vector<2x32xf32>
    %6 = vector.shape_cast %5 : vector<2x32xf32> to vector<1x2x32xf32>
    %cst = arith.constant dense<0.000000e+00> : vector<1xf32>
    %7 = vector.multi_reduction <add>, %6, %cst [1, 2] : vector<1x2x32xf32> to vector<1xf32>
    %8 = vector.shape_cast %7 : vector<1xf32> to vector<1x1x1xf32>
    %9 = vector.extract %8[0, 0, 0] : f32 from vector<1x1x1xf32>
    %10 = vector.broadcast %9 : f32 to vector<1x1xf32>
    %cst_5 = arith.constant 1.562500e-02 : f32
    %11 = vector.broadcast %cst_5 : f32 to vector<1x1xf32>
    %12 = arith.mulf %10, %11 : vector<1x1xf32>
    %c0_6 = arith.constant 0 : index
    %c0_7 = arith.constant 0 : index
    %13 = vector.load %arg4[%c0_6, %c0_7] : memref<1x1xf32, #tpu.memory_space<vmem>>, vector<1x1xf32>
    tpu.vector_store %arg4[%c0_6, %c0_7], %12 {strides = array<i32>} : memref<1x1xf32, #tpu.memory_space<vmem>>, vector<1x1xf32>,
    return
  }
  func.func @transform_0(%arg0: i32) -> (i32, i32) {
    %c0_i32 = arith.constant 0 : i32
    %c0_i32_0 = arith.constant 0 : i32
    %c0_i32_1 = arith.constant 0 : i32
    return %c0_i32, %c0_i32_0 : i32, i32
  }
  func.func @transform_1(%arg0: i32) -> (i32, i32) {
    %c0_i32 = arith.constant 0 : i32
    %c0_i32_0 = arith.constant 0 : i32
    %c0_i32_1 = arith.constant 0 : i32
    return %c0_i32, %c0_i32_0 : i32, i32
  }
  func.func @transform_2(%arg0: i32) -> (i32, i32) {
    %c0_i32 = arith.constant 0 : i32
    %c0_i32_0 = arith.constant 0 : i32
    %c0_i32_1 = arith.constant 0 : i32
    return %c0_i32, %c0_i32_0 : i32, i32
  }
  func.func @transform_3(%arg0: i32) -> (i32, i32) {
    %c0_i32 = arith.constant 0 : i32
    %c0_i32_0 = arith.constant 0 : i32
    %c0_i32_1 = arith.constant 0 : i32
    return %c0_i32, %c0_i32_0 : i32, i32
  }
}

</mosaic_0001>

<llo_original>
// kernel: l1_loss.1
$region0: #{l1_loss.1}
  #allocation0 [shape = 'u32[]', space=smem, size = 0x4, offset = 0x4, fixed_abs, tag = 'smem constant byte address 0x4 - core index']
  #allocation1 [shape = 'u32[144,128]{1,0:T(1,128)}', space=vmem, size = 0x12000, scoped, tag = 'internal scratch']
  %s0 = inlined_call_operand.vmem [shape: f32[2,32], index: 0, kind: input, shape index: {}]
  %s1 = inlined_call_operand.vmem [shape: f32[2,32], index: 1, kind: input, shape index: {}]
  %s2 = inlined_call_operand.vmem [shape: f32[2,32], index: 2, kind: input, shape index: {}]
  %s3 = inlined_call_operand.hbm [shape: f32[1,1], index: 3, kind: output, shape index: {}]
  %s4 = sld [smem:[#allocation0]]
  $region22: #{l1_loss.1} parent=0
    _
  %s6 = ssub.s32 1, %s4
  %s7 = scalar_select 0, %s6, %s4
  $region1: #{l1_loss.1} parent=0
    #allocation2 [shape = 'u8[512]{0}', space=vmem, size = 0x400, scoped, tag = 'output window, operand 0, single buffered']
    #allocation3 [shape = 's32[1]{0}', space=sflag, size = 0x4, scoped, tag = 'scoped memory for l1_loss.1']
    %8 = vsyncpa [#allocation3], 0
    // Predicated region
    $region2: #{l1_loss.1} parent=1 // pred_check
      _
    $region3: #{l1_loss.1} parent=1 // pred_check_branch
      %10 = sbr.rel (0) target = $region5
    $region4: #{l1_loss.1} parent=1 // pred_region
      _
    $region5: #{l1_loss.1} parent=1 // pred_fallthru
      _
    // Predicated region
    $region6: #{l1_loss.1} parent=1 // pred_check
      _
    $region7: #{l1_loss.1} parent=1 // pred_check_branch
      %12 = sbr.rel (0) target = $region9
    $region8: #{l1_loss.1} parent=1 // pred_region
      _
    $region9: #{l1_loss.1} parent=1 // pred_fallthru
      _
    // Predicated region
    $region10: #{l1_loss.1} parent=1 // pred_check
      _
    $region11: #{l1_loss.1} parent=1 // pred_check_branch
      %14 = sbr.rel (0) target = $region13
    $region12: #{l1_loss.1} parent=1 // pred_region
      _
    $region13: #{l1_loss.1} parent=1 // pred_fallthru
      _
    %v15 = vld [vmem:[%s0] sm:$0x3]
    %v16 = vld [vmem:[%s1] sm:$0x3]
    %v17 = vsub.f32 %v15, %v16
    %v18 = vand.u32 2147483647, %v17
    %v19 = vld [vmem:[%s2] sm:$0x3]
    %v20 = vmul.f32 %v18, %v19
    %vm21 = vcmask 254976
    %v22 = vsel %vm21, %v20, 0.0
    %23 = vadd.xlane.f32.xlu0 %v22
    %v24 = vpop.xlane.xlu0 %23
    %v25 = vrot.slane %v24, 4
    %v26 = vadd.f32 %v24, %v25
    %v27 = vrot.slane %v26, 2
    %v28 = vadd.f32 %v26, %v27
    %v29 = vrot.slane %v28, 1
    %v30 = vadd.f32 %v28, %v29
    %s31 = vtos %v30
    %v32 = vstv %s31
    %v33 = vmul.f32 %v32, 0.015625
    %vm34 = vcmask 0
    %35 = vst.msk [vmem:[#allocation2] sm:$0x1] %vm34, %v33
    // Predicated region
    $region14: #{l1_loss.1} parent=1 // pred_check
      _
    $region15: #{l1_loss.1} parent=1 // pred_check_branch
      %37 = sbr.rel (0) target = $region17
    $region16: #{l1_loss.1} parent=1 // pred_region
      %s39 = ssub.s32 16, 16
      %40 = vsyncadd [#allocation3], %s39
      %s42 = sshll.u32 [#allocation2], 4
      %s43 = int_to_ptr.vmem [resolvable:$true] %s42
      %45 = dma.vmem_to_hbm [thread:$0]  %s43, 16, %s3, [#allocation3]
    $region17: #{l1_loss.1} parent=1 // pred_fallthru
      _
    // Predicated region
    $region18: #{l1_loss.1} parent=1 // pred_check
      _
    $region19: #{l1_loss.1} parent=1 // pred_check_branch
      %47 = sbr.rel (0) target = $region21
    $region20: #{l1_loss.1} parent=1 // pred_region
      %48 = dma.done [#allocation3], 16
    $region21: #{l1_loss.1} parent=1 // pred_fallthru
      _
    %49 = vsyncpa [#allocation3], 1

</llo_original>
